<compile_context>
chip_gen: v7x
topology: tpu7x:2x2x1
jax: 0.10.0
libtpu: 0.0.40
codegen_flags: <defaults>
</compile_context>

<pallas_src>
import functools

import jax
import jax.numpy as jnp
from jax.experimental import pallas as pl
from jax.experimental.pallas import tpu as pltpu

LN_EPS = 1e-5
LANES = 128
MIN_TILE = 256      # packed rows; below this per-grid-step overhead dominates
TARGET_STEPS = 8    # >= 2 TensorCores x >= 4 pipeline stages (v7x megacore)


def _round_up(n, m):
    return ((n + m - 1) // m) * m


def _default_block_rows():
    """Bigger tiles on 128 MiB-VMEM parts (v5e/v6e), smaller on 64 MiB (v7x)."""
    try:
        info_fn = getattr(pltpu, "get_tpu_info", None)
        vmem = getattr(info_fn(), "vmem_capacity_bytes", 64 * 2**20) if info_fn else 64 * 2**20
    except Exception:
        vmem = 64 * 2**20
    return 4096 if vmem >= 96 * 2**20 else 2048


def _pick_tile(n_packed, block_rows):
    # >= TARGET_STEPS grid steps for big batches, >= MIN_TILE rows per step, never
    # (much) more rows than the array actually has.
    target = max(MIN_TILE, _round_up(pl.cdiv(n_packed, TARGET_STEPS), 8))
    tile = min(max(8, block_rows), target, _round_up(n_packed, 8))
    return _round_up(tile, 8)


def dense_residual_kernel(x_ref, wm_ref, avg_ref, gb_ref, o_ref):
    # x_ref:   (TB, 128)   lane-dense tile: P = 128 // F original rows per packed row
    # wm_ref:  (128, 256)  [ block-diag W.T | block-diag (W.T @ avg) ]  (activation dtype)
    # avg_ref: (128, 128)  block-diag per-segment averaging matrix (1/F blocks)
    # gb_ref:  (2, 128)    row 0 = gamma tiled to 128 lanes, row 1 = beta tiled (f32)
    x = x_ref[...]  # stays in native dtype; no f32 copy materialized here

    # Fused linear + segment-mean: one MXU pass per 256-row group on v6e/v7x.
    zm = jnp.dot(x, wm_ref[...], preferred_element_type=jnp.float32)   # (TB, 256) f32
    z = zm[:, :LANES]          # x @ W.T              (per F-lane segment)
    mean = zm[:, LANES:]       # segment mean of z, broadcast across the segment

    # Centered variance (numerically robust) — single remaining stats matmul.
    d = z - mean
    var = jnp.dot((d * d).astype(avg_ref.dtype), avg_ref[...],
                  preferred_element_type=jnp.float32)

    zn = d * jax.lax.rsqrt(var + LN_EPS)              # rsqrt -> EUP slot (free-ish)
    zn = zn * gb_ref[0:1, :] + gb_ref[1:2, :]         # gamma, beta

    # Dropout(p=0.0) is the identity; ReLU; residual add (f32 math, store in out dtype).
    o_ref[...] = (x.astype(jnp.float32) + jnp.maximum(zn, 0.0)).astype(o_ref.dtype)


@functools.partial(jax.jit, static_argnames=("block_rows",))
def _dense_residual(x, w, gamma, beta, *, block_rows):
    B, F = x.shape
    if LANES % F != 0:
        # TODO(synk): add an unpacked fallback kernel for F that does not divide 128.
        raise NotImplementedError("lane-packed path assumes mid_features divides 128")
    P = LANES // F  # original rows packed per lane-dense row (4 for F=32)

    # ---- tiny host-side constants (built once per compile) -------------------
    compute_dtype = jnp.bfloat16 if x.dtype == jnp.bfloat16 else jnp.float32
    wt = w.T.astype(jnp.float32)                                        # (F, F)
    eye_p = jnp.eye(P, dtype=jnp.float32)
    wt_bd = jnp.kron(eye_p, wt)                                         # (128, 128)
    avg_bd = jnp.kron(eye_p, jnp.full((F, F), 1.0 / F, jnp.float32))    # (128, 128)
    # [linear | mean]: columns 128..255 compute the per-segment mean of z directly.
    wm_bd = jnp.concatenate([wt_bd, wt_bd @ avg_bd], axis=1).astype(compute_dtype)
    avg_bd = avg_bd.astype(compute_dtype)
    gb = jnp.stack([jnp.tile(gamma.astype(jnp.float32), P),
                    jnp.tile(beta.astype(jnp.float32), P)])             # (2, 128)

    # ---- lane-dense packing (free reshape when B % P == 0) --------------------
    n_packed = pl.cdiv(B, P)
    b_pad = n_packed * P
    if b_pad != B:
        # TODO(synk): copy only the <= P-1 ragged tail rows instead of whole-array pad/slice.
        x_in = jnp.pad(x, ((0, b_pad - B), (0, 0)))
    else:
        x_in = x
    xp = x_in.reshape(n_packed, LANES)   # P consecutive original rows per 128-lane row

    # ---- tiling: rely on masked partial last block (no padding to tile multiple) --
    tile = _pick_tile(n_packed, block_rows)
    grid = (pl.cdiv(n_packed, tile),)
    vmem_limit = 64 * 2**20 if block_rows >= 4096 else 32 * 2**20

    out = pl.pallas_call(
        dense_residual_kernel,
        out_shape=jax.ShapeDtypeStruct((n_packed, LANES), x.dtype),
        grid_spec=pltpu.PrefetchScalarGridSpec(
            num_scalar_prefetch=0,
            grid=grid,
            in_specs=[
                pl.BlockSpec((tile, LANES), lambda i: (i, 0)),        # packed x tile
                pl.BlockSpec((LANES, 2 * LANES), lambda i: (0, 0)),   # [W.T | W.T@avg] (DMA'd once)
                pl.BlockSpec((LANES, LANES), lambda i: (0, 0)),       # block-diag averager
                pl.BlockSpec((2, LANES), lambda i: (0, 0)),           # [gamma; beta]
            ],
            out_specs=pl.BlockSpec((tile, LANES), lambda i: (i, 0)),
        ),
        compiler_params=pltpu.CompilerParams(
            dimension_semantics=("parallel",),
            vmem_limit_bytes=vmem_limit,
        ),
    )(xp, wm_bd, avg_bd, gb)

    out = out.reshape(b_pad, F)
    return out[:B] if b_pad != B else out


def dense_residual(x, w, gamma, beta, *, block_rows=None):
    """out = x + relu(layer_norm(x @ W.T)).

    x: [B, F] (f32 or bf16); w: [F, F] in PyTorch layout (out_features, in_features);
    gamma/beta: [F] LayerNorm affine params. Output dtype == x.dtype.
    bf16 activations use native-bf16 matmuls (f32 accumulate); f32 stays exact f32.
    """
    if block_rows is None:
        block_rows = _default_block_rows()
    return _dense_residual(x, w, gamma, beta, block_rows=block_rows)


def reference(x, w, gamma, beta):
    z = jnp.dot(x, w.T, precision=jax.lax.Precision.HIGHEST)
    mean = jnp.mean(z, axis=-1, keepdims=True)
    var = jnp.mean((z - mean) ** 2, axis=-1, keepdims=True)
    zn = (z - mean) / jnp.sqrt(var + LN_EPS)
    zn = zn * gamma + beta
    return x + jnp.maximum(zn, 0.0)


if __name__ == "__main__":
    mid_features = 32

    key = jax.random.PRNGKey(0)
    kx1, kx2, kx3, kw, kg, kb = jax.random.split(key, 6)

    # Deterministic PyTorch-like init; non-trivial gamma/beta exercise the affine tiling.
    bound = 1.0 / jnp.sqrt(jnp.float32(mid_features))
    w = jax.random.uniform(kw, (mid_features, mid_features),
                           minval=-bound, maxval=bound, dtype=jnp.float32)
    gamma = 1.0 + 0.1 * jax.random.normal(kg, (mid_features,), dtype=jnp.float32)
    beta = 0.1 * jax.random.normal(kb, (mid_features,), dtype=jnp.float32)

    # 1) Small f32 check (single partial block).
    x1 = jax.random.normal(kx1, (8, mid_features), dtype=jnp.float32)
    out1 = jax.block_until_ready(dense_residual(x1, w, gamma, beta))
    ref1 = reference(x1, w, gamma, beta)
    assert out1.shape == x1.shape
    assert jnp.allclose(out1, ref1, atol=1e-4, rtol=1e-4), "f32 mismatch (small batch)"

    # 2) Medium f32 batch, default tiling (no pad, no slice: B % 4 == 0).
    x2 = jax.random.normal(kx2, (200, mid_features), dtype=jnp.float32)
    out2 = jax.block_until_ready(dense_residual(x2, w, gamma, beta))
    ref2 = reference(x2, w, gamma, beta)
    assert jnp.allclose(out2, ref2, atol=1e-4, rtol=1e-4), "f32 mismatch (default tile)"

    # 3) Same data with a small tile -> multi-step grid + masked partial last block.
    out2b = jax.block_until_ready(dense_residual(x2, w, gamma, beta, block_rows=16))
    assert jnp.allclose(out2b, ref2, atol=1e-4, rtol=1e-4), "f32 mismatch (multi-step grid)"

    # 4) Ragged batch (B % 4 != 0) -> tiny tail pad + final slice path.
    x3 = jax.random.normal(kx3, (203, mid_features), dtype=jnp.float32)
    out3 = jax.block_until_ready(dense_residual(x3, w, gamma, beta))
    ref3 = reference(x3, w, gamma, beta)
    assert out3.shape == x3.shape
    assert jnp.allclose(out3, ref3, atol=1e-4, rtol=1e-4), "f32 mismatch (ragged batch)"

    # 5) bf16 activations: native-bf16 matmuls (weights/stats in bf16, f32 accumulate).
    x4 = x2.astype(jnp.bfloat16)
    out4 = jax.block_until_ready(dense_residual(x4, w, gamma, beta))
    ref4 = reference(x4.astype(jnp.float32), w, gamma, beta)
    assert out4.dtype == jnp.bfloat16
    assert jnp.allclose(out4.astype(jnp.float32), ref4, atol=1e-1, rtol=1e-1), "bf16 mismatch"

    print("KERNEL_OK")
</pallas_src>

<mosaic_0001>
module attributes {stable_mosaic.version = 11 : i64} {
  func.func @dense_residual_kernel(%arg0: i32, %arg1: memref<8x128xf32, #tpu.memory_space<vmem>>, %arg2: memref<128x256xf32, #tpu.memory_space<vmem>>, %arg3: memref<128x128xf32, #tpu.memory_space<vmem>>, %arg4: memref<2x128xf32, #tpu.memory_space<vmem>>, %arg5: memref<8x128xf32, #tpu.memory_space<vmem>>) attributes {dimension_semantics = [#tpu.dimension_semantics<parallel>], iteration_bounds = array<i64: 1>, scalar_prefetch = 0 : i64, scratch_operands = 0 : i64, tpu.core_type = #tpu.core_type<tc>, window_params = [{transform_indices = @transform_0, window_bounds = array<i64: 8, 128>}, {pipeline_mode = #tpu.pipeline_mode<synchronous>, transform_indices = @transform_1, window_bounds = array<i64: 128, 256>}, {pipeline_mode = #tpu.pipeline_mode<synchronous>, transform_indices = @transform_2, window_bounds = array<i64: 128, 128>}, {pipeline_mode = #tpu.pipeline_mode<synchronous>, transform_indices = @transform_3, window_bounds = array<i64: 2, 128>}, {transform_indices = @transform_4, window_bounds = array<i64: 8, 128>}]} {
    %c0 = arith.constant 0 : index
    %c0_0 = arith.constant 0 : index
    %0 = vector.load %arg1[%c0, %c0_0] : memref<8x128xf32, #tpu.memory_space<vmem>>, vector<8x128xf32>
    %c0_1 = arith.constant 0 : index
    %c0_2 = arith.constant 0 : index
    %1 = vector.load %arg2[%c0_1, %c0_2] : memref<128x256xf32, #tpu.memory_space<vmem>>, vector<128x256xf32>
    %cst = arith.constant dense<0.000000e+00> : vector<8x256xf32>
    %2 = tpu.matmul %0, %1, %cst {dimension_numbers = #tpu.dot_dimension_numbers<[1], [0], [0], [1], [0, 0, 1, 1], [], []>} : vector<8x128xf32>, vector<128x256xf32>, vector<8x256xf32> -> vector<8x256xf32>
    %3 = vector.extract_strided_slice %2 {offsets = [0, 0], sizes = [8, 128], strides = [1, 1]} : vector<8x256xf32> to vector<8x128xf32>
    %4 = vector.extract_strided_slice %2 {offsets = [0, 128], sizes = [8, 128], strides = [1, 1]} : vector<8x256xf32> to vector<8x128xf32>
    %5 = arith.subf %3, %4 : vector<8x128xf32>
    %6 = arith.mulf %5, %5 : vector<8x128xf32>
    %c0_3 = arith.constant 0 : index
    %c0_4 = arith.constant 0 : index
    %7 = vector.load %arg3[%c0_3, %c0_4] : memref<128x128xf32, #tpu.memory_space<vmem>>, vector<128x128xf32>
    %cst_5 = arith.constant dense<0.000000e+00> : vector<8x128xf32>
    %8 = tpu.matmul %6, %7, %cst_5 {dimension_numbers = #tpu.dot_dimension_numbers<[1], [0], [0], [1], [0, 0, 1, 1], [], []>} : vector<8x128xf32>, vector<128x128xf32>, vector<8x128xf32> -> vector<8x128xf32>
    %cst_6 = arith.constant 9.99999974E-6 : f32
    %9 = vector.broadcast %cst_6 : f32 to vector<8x128xf32>
    %10 = arith.addf %8, %9 : vector<8x128xf32>
    %11 = math.rsqrt %10 : vector<8x128xf32>
    %12 = arith.mulf %5, %11 : vector<8x128xf32>
    %c0_7 = arith.constant 0 : index
    %c0_8 = arith.constant 0 : index
    %13 = vector.load %arg4[%c0_7, %c0_8] : memref<2x128xf32, #tpu.memory_space<vmem>>, vector<1x128xf32>
    %14 = vector.broadcast %13 : vector<1x128xf32> to vector<8x128xf32>
    %15 = arith.mulf %12, %14 : vector<8x128xf32>
    %c1 = arith.constant 1 : index
    %c0_9 = arith.constant 0 : index
    %16 = vector.load %arg4[%c1, %c0_9] : memref<2x128xf32, #tpu.memory_space<vmem>>, vector<1x128xf32>
    %17 = vector.broadcast %16 : vector<1x128xf32> to vector<8x128xf32>
    %18 = arith.addf %15, %17 : vector<8x128xf32>
    %cst_10 = arith.constant 0.000000e+00 : f32
    %19 = vector.broadcast %cst_10 : f32 to vector<8x128xf32>
    %20 = arith.maximumf %18, %19 : vector<8x128xf32>
    %21 = arith.addf %0, %20 : vector<8x128xf32>
    %c0_11 = arith.constant 0 : index
    %c0_12 = arith.constant 0 : index
    %22 = vector.load %arg5[%c0_11, %c0_12] : memref<8x128xf32, #tpu.memory_space<vmem>>, vector<8x128xf32>
    tpu.vector_store %arg5[%c0_11, %c0_12], %21 {strides = array<i32>} : memref<8x128xf32, #tpu.memory_space<vmem>>, vector<8x128xf32>,
    return
  }
  func.func @transform_0(%arg0: i32) -> (i32, i32) {
    %c0_i32 = arith.constant 0 : i32
    %c0_i32_0 = arith.constant 0 : i32
    return %arg0, %c0_i32 : i32, i32
  }
  func.func @transform_1(%arg0: i32) -> (i32, i32) {
    %c0_i32 = arith.constant 0 : i32
    %c0_i32_0 = arith.constant 0 : i32
    %c0_i32_1 = arith.constant 0 : i32
    return %c0_i32, %c0_i32_0 : i32, i32
  }
  func.func @transform_2(%arg0: i32) -> (i32, i32) {
    %c0_i32 = arith.constant 0 : i32
    %c0_i32_0 = arith.constant 0 : i32
    %c0_i32_1 = arith.constant 0 : i32
    return %c0_i32, %c0_i32_0 : i32, i32
  }
  func.func @transform_3(%arg0: i32) -> (i32, i32) {
    %c0_i32 = arith.constant 0 : i32
    %c0_i32_0 = arith.constant 0 : i32
    %c0_i32_1 = arith.constant 0 : i32
    return %c0_i32, %c0_i32_0 : i32, i32
  }
  func.func @transform_4(%arg0: i32) -> (i32, i32) {
    %c0_i32 = arith.constant 0 : i32
    %c0_i32_0 = arith.constant 0 : i32
    return %arg0, %c0_i32 : i32, i32
  }
}

</mosaic_0001>

<llo_original>
// kernel: tile.13
$region0: #{tile.13}
  #allocation0 [shape = 's32[1]{0}', space=sflag, size = 0x4, scoped, tag = 'scoped memory for tile.13']
  %s0 = inlined_call_operand.vmem [shape: f32[32], index: 0, kind: input, shape index: {}]
  %s1 = inlined_call_operand.vmem [shape: f32[4,32], index: 1, kind: output, shape index: {}]
  // Predicated region
  $region2: #{tile.13} parent=0 // pred_check
    _
  $region3: #{tile.13} parent=0 // pred_check_branch
    %3 = sbr.rel (0) target = $region5
  $region4: #{tile.13} parent=0 // pred_region
    _
  $region5: #{tile.13} parent=0 // pred_fallthru
    _
  %v4 = vld [vmem:[%s0] ss:$0 sm:$0xff]
  %5 = vst [vmem:[%s1] sm:$0xf] %v4

// kernel: tile.18
$region0: #{tile.18}
  %s0 = inlined_call_operand.vmem [shape: f32[4,32], index: 0, kind: input, shape index: {}]
  %s1 = inlined_call_operand.vmem [shape: f32[1,128], index: 1, kind: output, shape index: {}]
  $region1: #{tile.18} parent=0
    #allocation0 [shape = 'u8[4096]{0}', space=vmem, size = 0x1000, scoped, tag = 'scoped mem for output reshape']
    #allocation1 [shape = 'u8[4096]{0}', space=vmem, size = 0x1000, scoped, tag = 'scoped mem for input reshape']
    %s3 = sshllo.u32 0, 4
    %v4 = vld [vmem:[%s0] sm:%s3]
    %5 = vst [vmem:[#allocation1] sm:%s3] %v4
    %v6 = vld [vmem:[#allocation1] sm:$0x1]
    %vm7 = vcmask 261120
    %8 = vst.msk [vmem:[#allocation0] sm:$0x1] %vm7, %v6
    %s9 = scalar_lea.vmem [#allocation1], 3
    %v10 = vld [vmem:[%s9] sm:$0x1]
    %11 = vrot.lane.b32.xlu0 %v10, 96
    %v12 = vpop.permute.xlu0 %11
    %vm13 = vcmask 1048320
    %14 = vst.msk [vmem:[#allocation0] sm:$0x1] %vm13, %v12
    %s15 = scalar_lea.vmem [#allocation1], 2
    %v16 = vld [vmem:[%s15] sm:$0x1]
    %17 = vrot.lane.b32.xlu0 %v16, 64
    %v18 = vpop.permute.xlu0 %17
    %vm19 = vcmask 785920
    %20 = vst.msk [vmem:[#allocation0] sm:$0x1] %vm19, %v18
    %s21 = scalar_lea.vmem [#allocation1], 1
    %v22 = vld [vmem:[%s21] sm:$0x1]
    %23 = vrot.lane.b32.xlu0 %v22, 32
    %v24 = vpop.permute.xlu0 %23
    %vm25 = vcmask 523520
    %26 = vst.msk [vmem:[#allocation0] sm:$0x1] %vm25, %v24
    %s28 = sshllo.u32 0, 1
    %v30 = vld [vmem:[#allocation0] sm:%s28]
    %s31 = sshllo.u32 0, 1
    %32 = vst [vmem:[%s1] sm:%s31] %v30

// kernel: _dense_residual.1
$region0: #{_dense_residual.1}
  #allocation0 [shape = 'u32[]', space=smem, size = 0x4, offset = 0x4, fixed_abs, tag = 'smem constant byte address 0x4 - core index']
  #allocation1 [shape = 'u32[144,128]{1,0:T(1,128)}', space=vmem, size = 0x12000, scoped, tag = 'internal scratch']
  %s0 = inlined_call_operand.vmem [shape: f32[2,128], index: 0, kind: input, shape index: {}]
  %s1 = inlined_call_operand.vmem [shape: f32[128,256], index: 1, kind: input, shape index: {}]
  %s2 = inlined_call_operand.vmem [shape: f32[128,128], index: 2, kind: input, shape index: {}]
  %s3 = inlined_call_operand.vmem [shape: f32[2,128], index: 3, kind: input, shape index: {}]
  %s4 = inlined_call_operand.vmem [shape: f32[2,128], index: 4, kind: output, shape index: {}]
  %s5 = sld [smem:[#allocation0]]
  $region56: #{_dense_residual.1} parent=0
    _
  %s7 = ssub.s32 1, %s5
  %s8 = scalar_select 0, %s7, %s5
  $region1: #{_dense_residual.1} parent=0
    #allocation2 [shape = 'u8[4096]{0}', space=vmem, size = 0x1000, scoped, tag = 'output window, operand 0, single buffered']
    // Predicated region
    $region2: #{_dense_residual.1} parent=1 // pred_check
      _
    $region3: #{_dense_residual.1} parent=1 // pred_check_branch
      %10 = sbr.rel (0) target = $region5
    $region4: #{_dense_residual.1} parent=1 // pred_region
      _
    $region5: #{_dense_residual.1} parent=1 // pred_fallthru
      _
    // Predicated region
    $region6: #{_dense_residual.1} parent=1 // pred_check
      _
    $region7: #{_dense_residual.1} parent=1 // pred_check_branch
      %12 = sbr.rel (0) target = $region9
    $region8: #{_dense_residual.1} parent=1 // pred_region
      _
    $region9: #{_dense_residual.1} parent=1 // pred_fallthru
      _
    // Predicated region
    $region10: #{_dense_residual.1} parent=1 // pred_check
      _
    $region11: #{_dense_residual.1} parent=1 // pred_check_branch
      %14 = sbr.rel (0) target = $region13
    $region12: #{_dense_residual.1} parent=1 // pred_region
      _
    $region13: #{_dense_residual.1} parent=1 // pred_fallthru
      _
    // Predicated region
    $region14: #{_dense_residual.1} parent=1 // pred_check
      _
    $region15: #{_dense_residual.1} parent=1 // pred_check_branch
      %16 = sbr.rel (0) target = $region17
    $region16: #{_dense_residual.1} parent=1 // pred_region
      _
    $region17: #{_dense_residual.1} parent=1 // pred_fallthru
      _
    %v17 = vld [vmem:[%s0] sm:$0xff]
    %v18 = vld [vmem:[%s1] sm:$0xff]
    %v19 = vld [vmem:[%s1 + $0x8] sm:$0xff]
    %v20 = vld [vmem:[%s1 + $0x10] sm:$0xff]
    %v21 = vld [vmem:[%s1 + $0x18] sm:$0xff]
    %v22 = vld [vmem:[%s1 + $0x20] sm:$0xff]
    %v23 = vld [vmem:[%s1 + $0x28] sm:$0xff]
    %v24 = vld [vmem:[%s1 + $0x30] sm:$0xff]
    %v25 = vld [vmem:[%s1 + $0x38] sm:$0xff]
    %v26 = vld [vmem:[%s1 + $0x40] sm:$0xff]
    %v27 = vld [vmem:[%s1 + $0x48] sm:$0xff]
    %v28 = vld [vmem:[%s1 + $0x50] sm:$0xff]
    %v29 = vld [vmem:[%s1 + $0x58] sm:$0xff]
    %v30 = vld [vmem:[%s1 + $0x60] sm:$0xff]
    %v31 = vld [vmem:[%s1 + $0x68] sm:$0xff]
    %v32 = vld [vmem:[%s1 + $0x70] sm:$0xff]
    %v33 = vld [vmem:[%s1 + $0x78] sm:$0xff]
    %v34 = vld [vmem:[%s1 + $0x80] sm:$0xff]
    %v35 = vld [vmem:[%s1 + $0x88] sm:$0xff]
    %v36 = vld [vmem:[%s1 + $0x90] sm:$0xff]
    %v37 = vld [vmem:[%s1 + $0x98] sm:$0xff]
    %v38 = vld [vmem:[%s1 + $0xa0] sm:$0xff]
    %v39 = vld [vmem:[%s1 + $0xa8] sm:$0xff]
    %v40 = vld [vmem:[%s1 + $0xb0] sm:$0xff]
    %v41 = vld [vmem:[%s1 + $0xb8] sm:$0xff]
    %v42 = vld [vmem:[%s1 + $0xc0] sm:$0xff]
    %v43 = vld [vmem:[%s1 + $0xc8] sm:$0xff]
    %v44 = vld [vmem:[%s1 + $0xd0] sm:$0xff]
    %v45 = vld [vmem:[%s1 + $0xd8] sm:$0xff]
    %v46 = vld [vmem:[%s1 + $0xe0] sm:$0xff]
    %v47 = vld [vmem:[%s1 + $0xe8] sm:$0xff]
    %v48 = vld [vmem:[%s1 + $0xf0] sm:$0xff]
    %v49 = vld [vmem:[%s1 + $0xf8] sm:$0xff]
    %50 = vmatprep.subr.mxu0 %v19
    %51 = vmatpush1.msra.mxu0 %v18
    %52 = vmatprep.subr.mxu0 %v21
    %53 = vmatpush1.msra.mxu0 %v20
    %54 = vmatprep.subr.mxu0 %v23
    %55 = vmatpush1.msra.mxu0 %v22
    %56 = vmatprep.subr.mxu0 %v25
    %57 = vmatpush1.msra.mxu0 %v24
    %58 = vmatprep.subr.mxu0 %v27
    %59 = vmatpush1.msra.mxu0 %v26
    %60 = vmatprep.subr.mxu0 %v29
    %61 = vmatpush1.msra.mxu0 %v28
    %62 = vmatprep.subr.mxu0 %v31
    %63 = vmatpush1.msra.mxu0 %v30
    %64 = vmatprep.subr.mxu0 %v33
    %65 = vmatpush1.msra.mxu0 %v32
    %66 = vmatprep.subr.mxu0 %v35
    %67 = vmatpush1.msra.mxu0 %v34
    %68 = vmatprep.subr.mxu0 %v37
    %69 = vmatpush1.msra.mxu0 %v36
    %70 = vmatprep.subr.mxu0 %v39
    %71 = vmatpush1.msra.mxu0 %v38
    %72 = vmatprep.subr.mxu0 %v41
    %73 = vmatpush1.msra.mxu0 %v40
    %74 = vmatprep.subr.mxu0 %v43
    %75 = vmatpush1.msra.mxu0 %v42
    %76 = vmatprep.subr.mxu0 %v45
    %77 = vmatpush1.msra.mxu0 %v44
    %78 = vmatprep.subr.mxu0 %v47
    %79 = vmatpush1.msra.mxu0 %v46
    %80 = vmatprep.subr.mxu0 %v49
    %81 = vmatpush1.msra.mxu0 %v48
    %82 = vmatprep.subr.mxu0 0.0
    %83 = vmatpush1.msra.mxu0 0.0
    %84 = vmatprep.subr.mxu0 0.0
    %85 = vmatpush1.msra.mxu0 0.0
    %86 = vmatprep.subr.mxu0 0.0
    %87 = vmatpush1.msra.mxu0 0.0
    %88 = vmatprep.subr.mxu0 0.0
    %89 = vmatpush1.msra.mxu0 0.0
    %90 = vmatprep.subr.mxu0 0.0
    %91 = vmatpush1.msra.mxu0 0.0
    %92 = vmatprep.subr.mxu0 0.0
    %93 = vmatpush1.msra.mxu0 0.0
    %94 = vmatprep.subr.mxu0 0.0
    %95 = vmatpush1.msra.mxu0 0.0
    %96 = vmatprep.subr.mxu0 0.0
    %97 = vmatpush1.msra.mxu0 0.0
    %98 = vmatprep.subr.mxu0 0.0
    %99 = vmatpush1.msra.mxu0 0.0
    %100 = vmatprep.subr.mxu0 0.0
    %101 = vmatpush1.msra.mxu0 0.0
    %102 = vmatprep.subr.mxu0 0.0
    %103 = vmatpush1.msra.mxu0 0.0
    %104 = vmatprep.subr.mxu0 0.0
    %105 = vmatpush1.msra.mxu0 0.0
    %106 = vmatprep.subr.mxu0 0.0
    %107 = vmatpush1.msra.mxu0 0.0
    %108 = vmatprep.subr.mxu0 0.0
    %109 = vmatpush1.msra.mxu0 0.0
    %110 = vmatprep.subr.mxu0 0.0
    %111 = vmatpush1.msra.mxu0 0.0
    %112 = vmatprep.subr.mxu0 0.0
    %113 = vmatpush1.msra.mxu0 0.0
    %114 = vmatprep.mubr.f32.mxu0 0.0
    %115 = vmatmul.mubr.f32.gmra.mrb[0].mxu0 %v17
    %v116 = vpop.f32.mrb[0].mxu0
    %v117 = vadd.f32 0.0, %v116
    %v118 = vpop.f32.mrb[0].mxu0
    %v119 = vadd.f32 0.0, %v118
    %120 = vdwg.mxu0
    %v121 = vsub.f32 %v117, %v119
    %v122 = vmul.f32 %v121, %v121
    %v123 = vld [vmem:[%s2] sm:$0xff]
    %v124 = vld [vmem:[%s2 + $0x8] sm:$0xff]
    %v125 = vld [vmem:[%s2 + $0x10] sm:$0xff]
    %v126 = vld [vmem:[%s2 + $0x18] sm:$0xff]
    %v127 = vld [vmem:[%s2 + $0x20] sm:$0xff]
    %v128 = vld [vmem:[%s2 + $0x28] sm:$0xff]
    %v129 = vld [vmem:[%s2 + $0x30] sm:$0xff]
    %v130 = vld [vmem:[%s2 + $0x38] sm:$0xff]
    %v131 = vld [vmem:[%s2 + $0x40] sm:$0xff]
    %v132 = vld [vmem:[%s2 + $0x48] sm:$0xff]
    %v133 = vld [vmem:[%s2 + $0x50] sm:$0xff]
    %v134 = vld [vmem:[%s2 + $0x58] sm:$0xff]
    %v135 = vld [vmem:[%s2 + $0x60] sm:$0xff]
    %v136 = vld [vmem:[%s2 + $0x68] sm:$0xff]
    %v137 = vld [vmem:[%s2 + $0x70] sm:$0xff]
    %v138 = vld [vmem:[%s2 + $0x78] sm:$0xff]
    %139 = vmatprep.subr.mxu0 0.0
    %140 = vmatpush1.msra.mxu0 %v123
    %141 = vmatprep.subr.mxu0 0.0
    %142 = vmatpush1.msra.mxu0 %v124
    %143 = vmatprep.subr.mxu0 0.0
    %144 = vmatpush1.msra.mxu0 %v125
    %145 = vmatprep.subr.mxu0 0.0
    %146 = vmatpush1.msra.mxu0 %v126
    %147 = vmatprep.subr.mxu0 0.0
    %148 = vmatpush1.msra.mxu0 %v127
    %149 = vmatprep.subr.mxu0 0.0
    %150 = vmatpush1.msra.mxu0 %v128
    %151 = vmatprep.subr.mxu0 0.0
    %152 = vmatpush1.msra.mxu0 %v129
    %153 = vmatprep.subr.mxu0 0.0
    %154 = vmatpush1.msra.mxu0 %v130
    %155 = vmatprep.subr.mxu0 0.0
    %156 = vmatpush1.msra.mxu0 %v131
    %157 = vmatprep.subr.mxu0 0.0
    %158 = vmatpush1.msra.mxu0 %v132
    %159 = vmatprep.subr.mxu0 0.0
    %160 = vmatpush1.msra.mxu0 %v133
    %161 = vmatprep.subr.mxu0 0.0
    %162 = vmatpush1.msra.mxu0 %v134
    %163 = vmatprep.subr.mxu0 0.0
    %164 = vmatpush1.msra.mxu0 %v135
    %165 = vmatprep.subr.mxu0 0.0
    %166 = vmatpush1.msra.mxu0 %v136
    %167 = vmatprep.subr.mxu0 0.0
    %168 = vmatpush1.msra.mxu0 %v137
    %169 = vmatprep.subr.mxu0 0.0
    %170 = vmatpush1.msra.mxu0 %v138
    %171 = vmatprep.subr.mxu0 0.0
    %172 = vmatpush1.msra.mxu0 0.0
    %173 = vmatprep.subr.mxu0 0.0
    %174 = vmatpush1.msra.mxu0 0.0
    %175 = vmatprep.subr.mxu0 0.0
    %176 = vmatpush1.msra.mxu0 0.0
    %177 = vmatprep.subr.mxu0 0.0
    %178 = vmatpush1.msra.mxu0 0.0
    %179 = vmatprep.subr.mxu0 0.0
    %180 = vmatpush1.msra.mxu0 0.0
    %181 = vmatprep.subr.mxu0 0.0
    %182 = vmatpush1.msra.mxu0 0.0
    %183 = vmatprep.subr.mxu0 0.0
    %184 = vmatpush1.msra.mxu0 0.0
    %185 = vmatprep.subr.mxu0 0.0
    %186 = vmatpush1.msra.mxu0 0.0
    %187 = vmatprep.subr.mxu0 0.0
    %188 = vmatpush1.msra.mxu0 0.0
    %189 = vmatprep.subr.mxu0 0.0
    %190 = vmatpush1.msra.mxu0 0.0
    %191 = vmatprep.subr.mxu0 0.0
    %192 = vmatpush1.msra.mxu0 0.0
    %193 = vmatprep.subr.mxu0 0.0
    %194 = vmatpush1.msra.mxu0 0.0
    %195 = vmatprep.subr.mxu0 0.0
    %196 = vmatpush1.msra.mxu0 0.0
    %197 = vmatprep.subr.mxu0 0.0
    %198 = vmatpush1.msra.mxu0 0.0
    %199 = vmatprep.subr.mxu0 0.0
    %200 = vmatpush1.msra.mxu0 0.0
    %201 = vmatprep.subr.mxu0 0.0
    %202 = vmatpush1.msra.mxu0 0.0
    %203 = vmatprep.mubr.f32.mxu0 0.0
    %204 = vmatmul.mubr.f32.gmra.mrb[0].mxu0 %v122
    %v205 = vpop.f32.mrb[0].mxu0
    %v206 = vadd.f32 1e-05, %v205
    %v207 = vpop.f32.mrb[0].mxu0
    %208 = vdwg.mxu0
    %v209 = vrsqrt.pop %v206
    %v210 = vmul.f32 %v121, %v209
    %v211 = vld [vmem:[%s3] sm:$0x1]
    %v212 = vlaneseq
    %v213 = vshrl.u32 %v212, 7
    %v214 = vsub.s32 0, %v213
    %v215 = vrot.slane %v211, %v214
    %v216 = vmul.f32 %v210, %v215
    %v217 = vld [vmem:[%s3 + $0x1] sm:$0x1]
    %v218 = vlaneseq
    %v219 = vshrl.u32 %v218, 7
    %v220 = vsub.s32 0, %v219
    %v221 = vrot.slane %v217, %v220
    %v222 = vadd.f32 %v216, %v221
    %v223 = vmax.f32 %v222, 0.0
    %v224 = vadd.f32 %v17, %v223
    %225 = vst [vmem:[#allocation2] sm:$0xff] %v224
    // Predicated region
    $region18: #{_dense_residual.1} parent=1 // pred_check
      _
    $region19: #{_dense_residual.1} parent=1 // pred_check_branch
      %227 = sbr.rel (0) target = $region21
    $region20: #{_dense_residual.1} parent=1 // pred_region
      // Predicated region
      $region22: #{_dense_residual.1} parent=20 // pred_check
        _
      $region23: #{_dense_residual.1} parent=20 // pred_check_branch
        %229 = sbr.rel (0) target = $region25
      $region24: #{_dense_residual.1} parent=20 // pred_region
        // Predicated region
        $region26: #{_dense_residual.1} parent=24 // pred_check
          _
        $region27: #{_dense_residual.1} parent=24 // pred_check_branch
          %231 = sbr.rel target = $region29
        $region28: #{_dense_residual.1} parent=24 // pred_region
          // Predicated region
          $region41: #{_dense_residual.1} parent=28 // pred_check
            _
          $region42: #{_dense_residual.1} parent=28 // pred_check_branch
            %246 = sbr.rel (0) target = $region44
          $region43: #{_dense_residual.1} parent=28 // pred_region
            loop: start=0, step=1, limit=1
            $region45: #{_dense_residual.1} parent=43 // loop_pre_header
              _
            $region46: #{_dense_residual.1} parent=43 // loop_header
              %s249 = sphi 0, %s253
              %p250 = scmp.ge.s32.totalorder %s249, 1
              %s254 = sphi [#allocation2], [#allocation2]
              %s255 = sphi %s4, %s4
            $region47: #{_dense_residual.1} parent=43 // loop_header_branch
              %252 = sbr.rel (%p250) target = $region51
            $region48: #{_dense_residual.1} parent=43 // loop_body
              %v256 = vld [vmem:[%s254] sm:$0x3]
              %257 = vst [vmem:[%s255] sm:$0x3] %v256
            $region49: #{_dense_residual.1} parent=43 // loop_footer
              %s253 = sadd.s32 1, %s249
            $region50: #{_dense_residual.1} parent=43 // loop_footer_branch
              %248 = sbr.rel target = $region46
            $region51: #{_dense_residual.1} parent=43 // loop_exit
              _
          $region44: #{_dense_residual.1} parent=28 // pred_fallthru
            _
        $region29: #{_dense_residual.1} parent=24 // pred_fallthru
          _
        // Predicated region
        $region30: #{_dense_residual.1} parent=24 // pred_check
          _
        $region31: #{_dense_residual.1} parent=24 // pred_check_branch
          %233 = sbr.rel (0) target = $region33
        $region32: #{_dense_residual.1} parent=24 // pred_region
          loop: start=0, step=1, limit=1
          $region34: #{_dense_residual.1} parent=32 // loop_pre_header
            _
          $region35: #{_dense_residual.1} parent=32 // loop_header
            %s236 = sphi 0, %s240
            %p237 = scmp.ge.s32.totalorder %s236, 1
            %s241 = sphi [#allocation2], [#allocation2]
            %s242 = sphi %s4, %s4
          $region36: #{_dense_residual.1} parent=32 // loop_header_branch
            %239 = sbr.rel (%p237) target = $region40
          $region37: #{_dense_residual.1} parent=32 // loop_body
            %v243 = vld [vmem:[%s241] sm:$0x3]
            %244 = vst [vmem:[%s242] sm:$0x3] %v243
          $region38: #{_dense_residual.1} parent=32 // loop_footer
            %s240 = sadd.s32 1, %s236
          $region39: #{_dense_residual.1} parent=32 // loop_footer_branch
            %235 = sbr.rel target = $region35
          $region40: #{_dense_residual.1} parent=32 // loop_exit
            _
        $region33: #{_dense_residual.1} parent=24 // pred_fallthru
          _
      $region25: #{_dense_residual.1} parent=20 // pred_fallthru
        _
      %258 = vnop
    $region21: #{_dense_residual.1} parent=1 // pred_fallthru
      _
    // Predicated region
    $region52: #{_dense_residual.1} parent=1 // pred_check
      _
    $region53: #{_dense_residual.1} parent=1 // pred_check_branch
      %260 = sbr.rel (0) target = $region55
    $region54: #{_dense_residual.1} parent=1 // pred_region
      _
    $region55: #{_dense_residual.1} parent=1 // pred_fallthru
      _

</llo_original>
